<compile_context>
chip_gen: v7x
topology: tpu7x:2x2x1
jax: 0.10.0
libtpu: 0.0.40
codegen_flags: <defaults>
</compile_context>

<pallas_src>
import functools

import jax
import jax.numpy as jnp
from jax import lax
from jax.experimental import pallas as pl
from jax.experimental.pallas import tpu as pltpu

SMOOTHING = 0.1
CONFIDENCE = 1.0 - SMOOTHING

_LANE = 128
_SUBLANE = 8
# Per-input-buffer VMEM budget for one x tile (Pallas double-buffers it).
# Kept small because the kernel also holds tile-sized f32 / exp / iota
# temporaries; 2 MiB tiles are already ~85% of the HBM roofline.
_PER_BUFFER_VMEM_BUDGET = 2 * 1024 * 1024
_MAX_TILE_ROWS = 8192


def _label_smoothing_ce_kernel(x_ref, t_ref, out_ref, *, n_rows, num_classes, tile_m):
    # x_ref: (TM, C) native-dtype logits; t_ref: (TM, 1) int32; out_ref: (1, 8, 128) f32.

    # Row max on the native-dtype tile (exact for bf16; halves vld traffic for
    # this pass on narrow inputs), then cast to f32 for the rest.
    m = jnp.max(x_ref[...], axis=-1, keepdims=True).astype(jnp.float32)     # (TM, 1)
    x = x_ref[...].astype(jnp.float32)                                       # (TM, C)
    t = t_ref[...]                                                           # (TM, 1)

    # log-sum-exp in f32 (precision requirement).
    lse = jnp.log(jnp.sum(jnp.exp(x - m), axis=-1, keepdims=True))           # (TM, 1)

    # Fused weighted reduction replacing the separate target-gather and
    # row-sum:  loss_i = m_i + lse_i - sum_j x_ij * w_ij
    col = lax.broadcasted_iota(jnp.int32, x.shape, 1)                        # (TM, C)
    base_w = SMOOTHING / num_classes
    w = jnp.where(col == t, base_w + CONFIDENCE, base_w)                     # (TM, C)
    contrib = jnp.sum(x * w, axis=-1, keepdims=True)                         # (TM, 1)

    loss = (m + lse) - contrib                                               # (TM, 1)

    # Mask rows past the true batch size (ragged last tile: their data is
    # unspecified and may be NaN/Inf; the where() discards it).
    row = pl.program_id(0) * tile_m + lax.broadcasted_iota(jnp.int32, loss.shape, 0)
    loss = jnp.where(row < n_rows, loss, 0.0)

    # Lane/sublane-dense per-tile partial sum (unmasked vst); wrapper finishes
    # the mean.
    out_ref[...] = jnp.broadcast_to(jnp.sum(loss), (1, _SUBLANE, _LANE))


def label_smoothing_cross_entropy(x: jax.Array, target: jax.Array, *, tile_m=None) -> jax.Array:
    """x: (N, C) logits (f32/bf16); target: (N,) int class indices. Returns scalar f32 loss."""
    n, c = x.shape
    itemsize = jnp.dtype(x.dtype).itemsize
    sublane = max(_SUBLANE, 32 // itemsize)      # 8 for f32, 16 for bf16

    if tile_m is None:
        tile_m = _PER_BUFFER_VMEM_BUDGET // max(1, c * itemsize)
        tile_m = max(sublane, min(_MAX_TILE_ROWS, (tile_m // sublane) * sublane))
    else:
        tile_m = max(sublane, ((tile_m + sublane - 1) // sublane) * sublane)
    tile_m = min(tile_m, ((n + sublane - 1) // sublane) * sublane)

    num_tiles = pl.cdiv(n, tile_m)
    n_pad = num_tiles * tile_m

    # x is deliberately NOT padded (no extra full-array HBM copy); the last
    # block is ragged and masked in-kernel.  Only target (tiny) is padded so
    # its blocks stay in-bounds with well-defined values.
    t2d = target.astype(jnp.int32)
    if n_pad != n:
        t2d = jnp.pad(t2d, (0, n_pad - n))
    t2d = t2d.reshape(n_pad, 1)

    kernel = functools.partial(
        _label_smoothing_ce_kernel, n_rows=n, num_classes=c, tile_m=tile_m
    )

    cost = pl.CostEstimate(
        flops=6 * n * c,
        transcendentals=n * c,
        bytes_accessed=n * c * itemsize + n_pad * 4 + num_tiles * _SUBLANE * _LANE * 4,
    )

    partial_sums = pl.pallas_call(
        kernel,
        out_shape=jax.ShapeDtypeStruct((num_tiles, _SUBLANE, _LANE), jnp.float32),
        grid_spec=pltpu.PrefetchScalarGridSpec(
            num_scalar_prefetch=0,
            grid=(num_tiles,),
            in_specs=[
                pl.BlockSpec((tile_m, c), lambda i: (i, 0)),
                pl.BlockSpec((tile_m, 1), lambda i: (i, 0)),
            ],
            out_specs=pl.BlockSpec((1, _SUBLANE, _LANE), lambda i: (i, 0, 0)),
        ),
        compiler_params=pltpu.CompilerParams(
            dimension_semantics=("parallel",),
            vmem_limit_bytes=48 * 1024 * 1024,
        ),
        cost_estimate=cost,
    )(x, t2d)

    # Every lane of a tile's output block holds that tile's partial sum; pick
    # one element per tile, sum, and divide by the true batch size.
    return jnp.sum(partial_sums[:, 0, 0]) / n


def _reference(x, target, smoothing=SMOOTHING):
    logprobs = jax.nn.log_softmax(x.astype(jnp.float32), axis=-1)
    nll = -jnp.take_along_axis(logprobs, target[:, None].astype(jnp.int32), axis=-1)[:, 0]
    smooth = -jnp.mean(logprobs, axis=-1)
    loss = (1.0 - smoothing) * nll + smoothing * smooth
    return jnp.mean(loss)


if __name__ == "__main__":
    key = jax.random.PRNGKey(0)
    k1, k2, k3, k4 = jax.random.split(key, 4)

    # Case 1: small f32 logits, batch not a multiple of the sublane/tile size
    # (single ragged block, no x padding).
    N1, C1 = 10, 32
    x1 = jax.random.normal(k1, (N1, C1), dtype=jnp.float32)
    t1 = jax.random.randint(k2, (N1,), 0, C1, dtype=jnp.int32)
    out1 = label_smoothing_cross_entropy(x1, t1)
    jax.block_until_ready(out1)
    ref1 = _reference(x1, t1)
    assert jnp.allclose(out1, ref1, atol=1e-5, rtol=1e-5), (out1, ref1)

    # Case 2: bf16 logits, multi-tile grid (3 tiles) with a ragged last tile.
    N2, C2 = 40, 160
    x2 = jax.random.normal(k3, (N2, C2), dtype=jnp.float32).astype(jnp.bfloat16)
    t2 = jax.random.randint(k4, (N2,), 0, C2, dtype=jnp.int32)
    out2 = label_smoothing_cross_entropy(x2, t2, tile_m=16)
    jax.block_until_ready(out2)
    ref2 = _reference(x2, t2)
    assert jnp.allclose(out2, ref2, atol=1e-4, rtol=1e-4), (out2, ref2)

    # Case 3: auto tile size, f32, batch a multiple of the tile (no ragged block).
    N3, C3 = 64, 256
    x3 = jax.random.normal(k1, (N3, C3), dtype=jnp.float32)
    t3 = jax.random.randint(k2, (N3,), 0, C3, dtype=jnp.int32)
    out3 = label_smoothing_cross_entropy(x3, t3)
    jax.block_until_ready(out3)
    ref3 = _reference(x3, t3)
    assert jnp.allclose(out3, ref3, atol=1e-5, rtol=1e-5), (out3, ref3)

    print("KERNEL_OK")
</pallas_src>

<mosaic_0001>
module attributes {stable_mosaic.version = 11 : i64} {
  func.func @_label_smoothing_ce_kernel(%arg0: i32, %arg1: memref<16x32xf32, #tpu.memory_space<vmem>>, %arg2: memref<16x1xi32, #tpu.memory_space<vmem>>, %arg3: memref<1x8x128xf32, #tpu.memory_space<vmem>>) attributes {dimension_semantics = [#tpu.dimension_semantics<parallel>], iteration_bounds = array<i64: 1>, scalar_prefetch = 0 : i64, scratch_operands = 0 : i64, tpu.core_type = #tpu.core_type<tc>, window_params = [{transform_indices = @transform_0, window_bounds = array<i64: 16, 32>}, {transform_indices = @transform_1, window_bounds = array<i64: 16, 1>}, {transform_indices = @transform_2, window_bounds = array<i64: 1, 8, 128>}]} {
    %c0 = arith.constant 0 : index
    %c0_0 = arith.constant 0 : index
    %0 = vector.load %arg1[%c0, %c0_0] : memref<16x32xf32, #tpu.memory_space<vmem>>, vector<16x32xf32>
    %cst = arith.constant dense<0xFF800000> : vector<16xf32>
    %1 = vector.multi_reduction <maximumf>, %0, %cst [1] : vector<16x32xf32> to vector<16xf32>
    %2 = vector.shape_cast %1 : vector<16xf32> to vector<16x1xf32>
    %c0_1 = arith.constant 0 : index
    %c0_2 = arith.constant 0 : index
    %3 = vector.load %arg1[%c0_1, %c0_2] : memref<16x32xf32, #tpu.memory_space<vmem>>, vector<16x32xf32>
    %c0_3 = arith.constant 0 : index
    %c0_4 = arith.constant 0 : index
    %4 = vector.load %arg2[%c0_3, %c0_4] : memref<16x1xi32, #tpu.memory_space<vmem>>, vector<16x1xi32>
    %5 = vector.broadcast %2 : vector<16x1xf32> to vector<16x32xf32>
    %6 = arith.subf %3, %5 : vector<16x32xf32>
    %7 = math.exp %6 : vector<16x32xf32>
    %cst_5 = arith.constant dense<0.000000e+00> : vector<16xf32>
    %8 = vector.multi_reduction <add>, %7, %cst_5 [1] : vector<16x32xf32> to vector<16xf32>
    %9 = vector.shape_cast %8 : vector<16xf32> to vector<16x1xf32>
    %10 = math.log %9 : vector<16x1xf32>
    %11 = tpu.iota {dimensions = array<i32: 1>} : vector<16x32xi32>
    %12 = vector.broadcast %4 : vector<16x1xi32> to vector<16x32xi32>
    %13 = arith.cmpi eq, %11, %12 : vector<16x32xi32>
    %cst_6 = arith.constant 0.903124988 : f32
    %cst_7 = arith.constant 3.125000e-03 : f32
    %14 = vector.broadcast %cst_6 : f32 to vector<16x32xf32>
    %15 = vector.broadcast %cst_7 : f32 to vector<16x32xf32>
    %16 = arith.select %13, %14, %15 : vector<16x32xi1>, vector<16x32xf32>
    %17 = arith.mulf %3, %16 : vector<16x32xf32>
    %cst_8 = arith.constant dense<0.000000e+00> : vector<16xf32>
    %18 = vector.multi_reduction <add>, %17, %cst_8 [1] : vector<16x32xf32> to vector<16xf32>
    %19 = vector.shape_cast %18 : vector<16xf32> to vector<16x1xf32>
    %20 = arith.addf %2, %10 : vector<16x1xf32>
    %21 = arith.subf %20, %19 : vector<16x1xf32>
    %c16_i32 = arith.constant 16 : i32
    %22 = arith.muli %arg0, %c16_i32 : i32
    %23 = tpu.iota {dimensions = array<i32: 0>} : vector<16x1xi32>
    %24 = vector.broadcast %22 : i32 to vector<16x1xi32>
    %25 = arith.addi %24, %23 : vector<16x1xi32>
    %c10_i32 = arith.constant 10 : i32
    %26 = vector.broadcast %c10_i32 : i32 to vector<16x1xi32>
    %27 = arith.cmpi slt, %25, %26 : vector<16x1xi32>
    %cst_9 = arith.constant 0.000000e+00 : f32
    %28 = vector.broadcast %cst_9 : f32 to vector<16x1xf32>
    %29 = arith.select %27, %21, %28 : vector<16x1xi1>, vector<16x1xf32>
    %30 = vector.shape_cast %29 : vector<16x1xf32> to vector<1x16x1xf32>
    %cst_10 = arith.constant dense<0.000000e+00> : vector<1xf32>
    %31 = vector.multi_reduction <add>, %30, %cst_10 [1, 2] : vector<1x16x1xf32> to vector<1xf32>
    %32 = vector.shape_cast %31 : vector<1xf32> to vector<1x1x1xf32>
    %33 = vector.extract %32[0, 0, 0] : f32 from vector<1x1x1xf32>
    %34 = vector.broadcast %33 : f32 to vector<1x8x128xf32>
    %c0_11 = arith.constant 0 : index
    %c0_12 = arith.constant 0 : index
    %c0_13 = arith.constant 0 : index
    %35 = vector.load %arg3[%c0_11, %c0_12, %c0_13] : memref<1x8x128xf32, #tpu.memory_space<vmem>>, vector<1x8x128xf32>
    tpu.vector_store %arg3[%c0_11, %c0_12, %c0_13], %34 {strides = array<i32>} : memref<1x8x128xf32, #tpu.memory_space<vmem>>, vector<1x8x128xf32>,
    return
  }
  func.func @transform_0(%arg0: i32) -> (i32, i32) {
    %c0_i32 = arith.constant 0 : i32
    %c0_i32_0 = arith.constant 0 : i32
    return %arg0, %c0_i32 : i32, i32
  }
  func.func @transform_1(%arg0: i32) -> (i32, i32) {
    %c0_i32 = arith.constant 0 : i32
    %c0_i32_0 = arith.constant 0 : i32
    return %arg0, %c0_i32 : i32, i32
  }
  func.func @transform_2(%arg0: i32) -> (i32, i32, i32) {
    %c0_i32 = arith.constant 0 : i32
    %c0_i32_0 = arith.constant 0 : i32
    %c0_i32_1 = arith.constant 0 : i32
    return %arg0, %c0_i32, %c0_i32_0 : i32, i32, i32
  }
}

</mosaic_0001>

<llo_original>
// kernel: tpu_custom_call.1
$region0: #{tpu_custom_call.1}
  #allocation0 [shape = 'u32[]', space=smem, size = 0x4, offset = 0x4, fixed_abs, tag = 'smem constant byte address 0x4 - core index']
  #allocation1 [shape = 'u32[144,128]{1,0:T(1,128)}', space=vmem, size = 0x12000, scoped, tag = 'internal scratch']
  %s0 = inlined_call_operand.vmem [shape: f32[10,32], index: 0, kind: input, shape index: {}]
  %s1 = inlined_call_operand.vmem [shape: s32[16,1], index: 1, kind: input, shape index: {}]
  %s2 = inlined_call_operand.hbm [shape: f32[1,8,128], index: 2, kind: output, shape index: {}]
  %s3 = sld [smem:[#allocation0]]
  $region18: #{tpu_custom_call.1} parent=0
    _
  %s5 = ssub.s32 1, %s3
  %s6 = scalar_select 0, %s5, %s3
  $region1: #{tpu_custom_call.1} parent=0
    #allocation2 [shape = 'u8[4096]{0}', space=vmem, size = 0x1000, scoped, tag = 'output window, operand 0, single buffered']
    #allocation3 [shape = 's32[1]{0}', space=sflag, size = 0x4, scoped, tag = 'scoped memory for tpu_custom_call.1']
    %7 = vsyncpa [#allocation3], 0
    // Predicated region
    $region2: #{tpu_custom_call.1} parent=1 // pred_check
      _
    $region3: #{tpu_custom_call.1} parent=1 // pred_check_branch
      %9 = sbr.rel (0) target = $region5
    $region4: #{tpu_custom_call.1} parent=1 // pred_region
      _
    $region5: #{tpu_custom_call.1} parent=1 // pred_fallthru
      _
    // Predicated region
    $region6: #{tpu_custom_call.1} parent=1 // pred_check
      _
    $region7: #{tpu_custom_call.1} parent=1 // pred_check_branch
      %11 = sbr.rel (0) target = $region9
    $region8: #{tpu_custom_call.1} parent=1 // pred_region
      _
    $region9: #{tpu_custom_call.1} parent=1 // pred_fallthru
      _
    %v12 = vld [vmem:[%s0] sm:$0xff]
    %v13 = vld [vmem:[%s0 + $0x8] sm:$0xff]
    %vm14 = vcmask 261120
    %v15 = vsel %vm14, %v12, -inf
    %16 = vmax.xlane.f32.xlu0 %v15
    %v17 = vpop.xlane.xlu0 %16
    %v18 = vsel %vm14, %v13, -inf
    %19 = vmax.xlane.f32.xlu0 %v18
    %v20 = vpop.xlane.xlu0 %19
    %v21 = vld [vmem:[%s1] sm:$0xff]
    %v22 = vld [vmem:[%s1 + $0x8] sm:$0xff]
    %v23 = vsub.f32 %v12, %v17
    %v24 = vsub.f32 %v13, %v20
    %v25 = vmul.f32 %v23, 1.442695
    %v26 = vpow.pop %v25
    %v27 = vmul.f32 %v24, 1.442695
    %v28 = vpow.pop %v27
    %v29 = vsel %vm14, %v26, 0.0
    %30 = vadd.xlane.f32.xlu0 %v29
    %v31 = vpop.xlane.xlu0 %30
    %v32 = vsel %vm14, %v28, 0.0
    %33 = vadd.xlane.f32.xlu0 %v32
    %v34 = vpop.xlane.xlu0 %33
    %v35 = vlog2.pop %v31
    %v36 = vmul.f32 %v35, 0.6931472
    %v37 = vlog2.pop %v34
    %v38 = vmul.f32 %v37, 0.6931472
    %v39 = vlaneseq
    %v40 = vand.u32 %v39, 127
    %41 = vset.pattern.permute.xlu0 0
    %42 = vperm.xlu0 %41, %v21
    %v43 = vpop.permute.xlu0 %42
    %44 = vset.pattern.permute.xlu0 0
    %45 = vperm.xlu0 %44, %v22
    %v46 = vpop.permute.xlu0 %45
    %vm47 = vcmp.eq.s32.totalorder %v40, %v43
    %vm48 = vcmp.eq.s32.totalorder %v40, %v46
    %v49 = vsel %vm47, 0.903125, 0.003125
    %v50 = vsel %vm48, 0.903125, 0.003125
    %v51 = vmul.f32 %v12, %v49
    %v52 = vmul.f32 %v13, %v50
    %v53 = vsel %vm14, %v51, 0.0
    %54 = vadd.xlane.f32.xlu0 %v53
    %v55 = vpop.xlane.xlu0 %54
    %v56 = vsel %vm14, %v52, 0.0
    %57 = vadd.xlane.f32.xlu0 %v56
    %v58 = vpop.xlane.xlu0 %57
    %v59 = vadd.f32 %v17, %v36
    %v60 = vadd.f32 %v20, %v38
    %v61 = vsub.f32 %v59, %v55
    %v62 = vsub.f32 %v60, %v58
    %s63 = smul.u32 0, 16
    %v64 = vlaneseq
    %v65 = vshrl.u32 %v64, 7
    %v66 = vadd.s32 %v65, 8
    %v67 = vstv %s63
    %v68 = vadd.s32 %v67, %v65
    %v69 = vadd.s32 %v67, %v66
    %vm70 = vcmp.lt.s32.totalorder %v68, 10
    %vm71 = vcmp.lt.s32.totalorder %v69, 10
    %v72 = vsel %vm70, %v61, 0.0
    %v73 = vsel %vm71, %v62, 0.0
    %vm74 = vcmask 7168
    %v75 = vsel %vm74, %v72, 0.0
    %v76 = vsel %vm74, %v73, 0.0
    %v77 = vadd.f32 %v75, %v76
    %78 = vadd.xlane.f32.xlu0 %v77
    %v79 = vpop.xlane.xlu0 %78
    %v80 = vrot.slane %v79, 4
    %v81 = vadd.f32 %v79, %v80
    %v82 = vrot.slane %v81, 2
    %v83 = vadd.f32 %v81, %v82
    %v84 = vrot.slane %v83, 1
    %v85 = vadd.f32 %v83, %v84
    %s86 = vtos %v85
    %v87 = vstv %s86
    %88 = vst [vmem:[#allocation2] sm:$0xff] %v87
    // Predicated region
    $region10: #{tpu_custom_call.1} parent=1 // pred_check
      _
    $region11: #{tpu_custom_call.1} parent=1 // pred_check_branch
      %90 = sbr.rel (0) target = $region13
    $region12: #{tpu_custom_call.1} parent=1 // pred_region
      %s92 = ssub.s32 128, 128
      %93 = vsyncadd [#allocation3], %s92
      %s95 = sshll.u32 [#allocation2], 4
      %s96 = int_to_ptr.vmem [resolvable:$true] %s95
      %98 = dma.vmem_to_hbm [thread:$0]  %s96, 128, %s2, [#allocation3]
    $region13: #{tpu_custom_call.1} parent=1 // pred_fallthru
      _
    // Predicated region
    $region14: #{tpu_custom_call.1} parent=1 // pred_check
      _
    $region15: #{tpu_custom_call.1} parent=1 // pred_check_branch
      %100 = sbr.rel (0) target = $region17
    $region16: #{tpu_custom_call.1} parent=1 // pred_region
      %101 = dma.done [#allocation3], 128
    $region17: #{tpu_custom_call.1} parent=1 // pred_fallthru
      _
    %102 = vsyncpa [#allocation3], 1

</llo_original>
